<compile_context>
chip_gen: v7x
topology: tpu7x:2x2x1
jax: 0.10.0
libtpu: 0.0.40
codegen_flags: <defaults>
</compile_context>

<pallas_src>
import functools

import jax
import jax.numpy as jnp
from jax.experimental import pallas as pl
from jax.experimental.pallas import tpu as pltpu

EPS = 1e-5
LEAKINESS = 0.0  # EdgeLayer default (LeakyReLU(0.0) == ReLU)


def _round_up(x, m):
    return ((x + m - 1) // m) * m


def _auto_config():
    """Per-generation (tile_rows, vmem_limit_bytes)."""
    try:
        vmem_cap = int(pltpu.get_tpu_info().vmem_capacity_bytes)
    except Exception:
        vmem_cap = 64 * 1024 * 1024  # conservative fallback (v7x-sized)
    if vmem_cap >= 100 * 1024 * 1024:        # v5e / v6e: 128 MiB physical VMEM
        return 8192, 96 * 1024 * 1024
    return 4096, 48 * 1024 * 1024            # v7x: 64 MiB physical VMEM


def _activation(h, leakiness):
    if leakiness == 0.0:
        return jnp.maximum(h, 0.0)           # single VPU max
    return jnp.where(h >= 0, h, leakiness * h)


def _row_mask(i, tile_rows, n_rows):
    row = i * tile_rows + jax.lax.broadcasted_iota(jnp.int32, (tile_rows, 1), 0)
    return row < n_rows


def _col_stats(x, ones_row):
    """[column sum ; column sum-of-squares] via MXU: (1,te)@(te,F) -> (2, F) f32."""
    s1 = jnp.dot(ones_row, x, preferred_element_type=jnp.float32)
    s2 = jnp.dot(ones_row, x * x, preferred_element_type=jnp.float32)
    return jnp.concatenate([s1, s2], axis=0)


def _write_stats(stats_ref, h, i, *, n_rows, tile_rows, masked):
    """Write this tile's (2, F) partial stats; mask rows >= n_rows only on last tile."""
    ones = jnp.ones((1, tile_rows), jnp.float32)
    if masked:
        last = pl.num_programs(0) - 1

        @pl.when(i == last)
        def _():
            hm = jnp.where(_row_mask(i, tile_rows, n_rows), h, 0.0)
            stats_ref[0] = _col_stats(hm, ones)

        @pl.when(i != last)
        def _():
            stats_ref[0] = _col_stats(h, ones)
    else:
        stats_ref[0] = _col_stats(h, ones)


# --------------------------- kernels ---------------------------------------


def _input_stats_kernel(src_ref, dst_ref, edge_ref,
                        s_src_ref, s_dst_ref, s_edge_ref,
                        *, n_rows, tile_rows, masked):
    i = pl.program_id(0)
    ones = jnp.ones((1, tile_rows), jnp.float32)

    def write_all(mask):
        for x_ref, s_ref in ((src_ref, s_src_ref),
                             (dst_ref, s_dst_ref),
                             (edge_ref, s_edge_ref)):
            x = x_ref[...]
            if mask is not None:
                x = jnp.where(mask, x, 0.0)
            s_ref[0] = _col_stats(x, ones)

    if masked:
        last = pl.num_programs(0) - 1

        @pl.when(i == last)
        def _():
            write_all(_row_mask(i, tile_rows, n_rows))

        @pl.when(i != last)
        def _():
            write_all(None)
    else:
        write_all(None)


def _layer1_kernel(src_ref, dst_ref, edge_ref, wa_ref, wb_ref, wc_ref, c_ref,
                   h_ref, stats_ref,
                   *, n_rows, tile_rows, leakiness, masked, mm_dtype):
    i = pl.program_id(0)
    h = (jnp.dot(src_ref[...].astype(mm_dtype), wa_ref[...],
                 preferred_element_type=jnp.float32)
         + jnp.dot(dst_ref[...].astype(mm_dtype), wb_ref[...],
                   preferred_element_type=jnp.float32)
         + jnp.dot(edge_ref[...].astype(mm_dtype), wc_ref[...],
                   preferred_element_type=jnp.float32)
         + c_ref[...])
    h = _activation(h, leakiness)
    h_ref[...] = h.astype(h_ref.dtype)              # bf16 storage by default
    # Stats on the pre-cast f32 value (matches the f32 reference fold constants).
    _write_stats(stats_ref, h, i, n_rows=n_rows, tile_rows=tile_rows, masked=masked)


def _mid_layer_kernel(x_ref, w_ref, c_ref, h_ref, stats_ref,
                      *, n_rows, tile_rows, leakiness, masked, mm_dtype):
    i = pl.program_id(0)
    h = jnp.dot(x_ref[...].astype(mm_dtype), w_ref[...],
                preferred_element_type=jnp.float32) + c_ref[...]
    h = _activation(h, leakiness)
    h_ref[...] = h.astype(h_ref.dtype)
    _write_stats(stats_ref, h, i, n_rows=n_rows, tile_rows=tile_rows, masked=masked)


def _final_layer_kernel(x_ref, w_ref, c_ref, o_ref, *, mm_dtype):
    o_ref[...] = (jnp.dot(x_ref[...].astype(mm_dtype), w_ref[...],
                          preferred_element_type=jnp.float32)
                  + c_ref[...]).astype(o_ref.dtype)


# --------------------------- trace-time glue (tiny arrays) -----------------


def _bn_scale_shift(stats, n_rows, gamma, beta):
    """stats: (2, F) [sum; sumsq] -> per-column (scale, shift) of training-mode BN."""
    mean = stats[0] / n_rows
    var = jnp.maximum(stats[1] / n_rows - mean * mean, 0.0)   # one-pass, clamp fp error
    scale = gamma.reshape(-1) * jax.lax.rsqrt(var + EPS)
    shift = beta.reshape(-1) - mean * scale
    return scale, shift


# --------------------------- forward wrapper --------------------------------


def edge_layer_forward(src, dest, edge_attr, params, *,
                       leakiness=LEAKINESS, tile_rows=None,
                       mm_dtype=jnp.bfloat16, store_dtype=None,
                       vmem_limit_bytes=None):
    """src/dest: [E, F_x], edge_attr: [E, F_e] -> [E, F_o] (float32)."""
    E, fx = src.shape
    fe = edge_attr.shape[1]
    C = params["w3"].shape[1]
    f32 = jnp.float32
    if store_dtype is None:
        store_dtype = mm_dtype                       # bf16 h1/h2 by default

    auto_tile, auto_vmem = _auto_config()
    if tile_rows is None:
        tile_rows = auto_tile
    if vmem_limit_bytes is None:
        vmem_limit_bytes = auto_vmem

    # Tile rows: capped by tile_rows, at least 8, always a multiple of 8.
    te = _round_up(min(int(tile_rows), _round_up(E, 8)), 8)
    num_tiles = pl.cdiv(E, te)
    grid = (num_tiles,)
    masked = (te * num_tiles != E)                   # partial last tile

    row_spec = lambda F: pl.BlockSpec((te, F), lambda i: (i, 0))
    stat_spec = lambda F: pl.BlockSpec((1, 2, F), lambda i: (i, 0, 0))
    stat_shape = lambda F: jax.ShapeDtypeStruct((num_tiles, 2, F), f32)
    rep_spec = lambda a: pl.BlockSpec(a.shape, lambda i, _nd=a.ndim: (0,) * _nd)

    par = pltpu.CompilerParams(dimension_semantics=("parallel",),
                               vmem_limit_bytes=vmem_limit_bytes)

    # ---- pass 0: BN0 per-tile column stats over the (virtual) concat -------
    st_src, st_dst, st_edge = pl.pallas_call(
        functools.partial(_input_stats_kernel, n_rows=E, tile_rows=te, masked=masked),
        grid=grid,
        in_specs=[row_spec(fx), row_spec(fx), row_spec(fe)],
        out_specs=(stat_spec(fx), stat_spec(fx), stat_spec(fe)),
        out_shape=(stat_shape(fx), stat_shape(fx), stat_shape(fe)),
        compiler_params=par,
    )(src, dest, edge_attr)
    st_src = jnp.sum(st_src, axis=0)
    st_dst = jnp.sum(st_dst, axis=0)
    st_edge = jnp.sum(st_edge, axis=0)

    # ---- fold BN0 into Linear1 (W1 sliced per input piece at trace time) ---
    w1, c1 = params["w1"], params["c1"]
    g0, b0 = params["g0"], params["b0"]
    sc_s, sh_s = _bn_scale_shift(st_src, E, g0[:, :fx], b0[:, :fx])
    sc_d, sh_d = _bn_scale_shift(st_dst, E, g0[:, fx:2 * fx], b0[:, fx:2 * fx])
    sc_e, sh_e = _bn_scale_shift(st_edge, E, g0[:, 2 * fx:], b0[:, 2 * fx:])
    w1a = (w1[:fx] * sc_s[:, None]).astype(mm_dtype)
    w1b = (w1[fx:2 * fx] * sc_d[:, None]).astype(mm_dtype)
    w1c = (w1[2 * fx:] * sc_e[:, None]).astype(mm_dtype)
    c1f = (c1 + sh_s @ w1[:fx] + sh_d @ w1[fx:2 * fx] + sh_e @ w1[2 * fx:]).astype(f32)

    # ---- pass 1: h1 = act(x @ W1' + c1')  (+ per-tile BN1 stats) -----------
    h1, st1 = pl.pallas_call(
        functools.partial(_layer1_kernel, n_rows=E, tile_rows=te,
                          leakiness=leakiness, masked=masked, mm_dtype=mm_dtype),
        grid=grid,
        in_specs=[row_spec(fx), row_spec(fx), row_spec(fe),
                  rep_spec(w1a), rep_spec(w1b), rep_spec(w1c), rep_spec(c1f)],
        out_specs=(row_spec(C), stat_spec(C)),
        out_shape=(jax.ShapeDtypeStruct((E, C), store_dtype), stat_shape(C)),
        compiler_params=par,
    )(src, dest, edge_attr, w1a, w1b, w1c, c1f)
    st1 = jnp.sum(st1, axis=0)

    # ---- fold BN1 into Linear2 ----------------------------------------------
    sc1, sh1 = _bn_scale_shift(st1, E, params["g1"], params["b1"])
    w2f = (params["w2"] * sc1[:, None]).astype(mm_dtype)
    c2f = (params["c2"] + sh1 @ params["w2"]).astype(f32)

    # ---- pass 2: h2 = act(h1 @ W2' + c2')  (+ per-tile BN2 stats) -----------
    h2, st2 = pl.pallas_call(
        functools.partial(_mid_layer_kernel, n_rows=E, tile_rows=te,
                          leakiness=leakiness, masked=masked, mm_dtype=mm_dtype),
        grid=grid,
        in_specs=[row_spec(C), rep_spec(w2f), rep_spec(c2f)],
        out_specs=(row_spec(C), stat_spec(C)),
        out_shape=(jax.ShapeDtypeStruct((E, C), store_dtype), stat_shape(C)),
        compiler_params=par,
    )(h1, w2f, c2f)
    st2 = jnp.sum(st2, axis=0)

    # ---- fold BN2 into Linear3 ----------------------------------------------
    sc2, sh2 = _bn_scale_shift(st2, E, params["g2"], params["b2"])
    w3f = (params["w3"] * sc2[:, None]).astype(mm_dtype)
    c3f = (params["c3"] + sh2 @ params["w3"]).astype(f32)

    # ---- pass 3: out = h2 @ W3' + c3' ---------------------------------------
    out = pl.pallas_call(
        functools.partial(_final_layer_kernel, mm_dtype=mm_dtype),
        grid=grid,
        in_specs=[row_spec(C), rep_spec(w3f), rep_spec(c3f)],
        out_specs=row_spec(C),
        out_shape=jax.ShapeDtypeStruct((E, C), f32),
        compiler_params=par,
    )(h2, w3f, c3f)

    return out


# --------------------------- pure-JAX reference ------------------------------


def _bn_train(x, gamma, beta):
    mean = jnp.mean(x, axis=0, keepdims=True)
    var = jnp.mean((x - mean) ** 2, axis=0, keepdims=True)
    return (x - mean) * jax.lax.rsqrt(var + EPS) * gamma + beta


def _leaky(x, slope):
    return jnp.where(x >= 0, x, slope * x)


def edge_layer_reference(src, dest, edge_attr, params):
    x = jnp.concatenate([src, dest, edge_attr], axis=1)
    h = _bn_train(x, params["g0"], params["b0"]) @ params["w1"] + params["c1"]
    h = _leaky(h, LEAKINESS)
    h = _bn_train(h, params["g1"], params["b1"]) @ params["w2"] + params["c2"]
    h = _leaky(h, LEAKINESS)
    h = _bn_train(h, params["g2"], params["b2"]) @ params["w3"] + params["c3"]
    return h


def init_params(key, node_in, edge_in, edge_out):
    d_in = 2 * node_in + edge_in
    ks = jax.random.split(key, 8)
    u = lambda k, shape, bound: jax.random.uniform(k, shape, jnp.float32, -bound, bound)
    return {
        "g0": 1.0 + 0.1 * jax.random.normal(ks[0], (1, d_in), jnp.float32),
        "b0": 0.1 * jax.random.normal(ks[1], (1, d_in), jnp.float32),
        "g1": 1.0 + 0.1 * jax.random.normal(ks[2], (1, edge_out), jnp.float32),
        "b1": 0.1 * jax.random.normal(ks[3], (1, edge_out), jnp.float32),
        "g2": 1.0 + 0.1 * jax.random.normal(ks[4], (1, edge_out), jnp.float32),
        "b2": 0.1 * jax.random.normal(ks[5], (1, edge_out), jnp.float32),
        # Linear weights stored pre-transposed: [in, out] so kernels do x @ W.
        "w1": u(ks[6], (d_in, edge_out), (1.0 / d_in) ** 0.5),
        "c1": jnp.zeros((1, edge_out), jnp.float32),
        "w2": u(ks[7], (edge_out, edge_out), (1.0 / edge_out) ** 0.5),
        "c2": jnp.full((1, edge_out), 0.01, jnp.float32),
        "w3": u(jax.random.fold_in(key, 99), (edge_out, edge_out),
                (1.0 / edge_out) ** 0.5),
        "c3": jnp.full((1, edge_out), -0.01, jnp.float32),
    }


if __name__ == "__main__":
    key = jax.random.PRNGKey(0)
    E, node_in, edge_in, edge_out = 256, 16, 8, 32

    k_src, k_dst, k_edge, k_par = jax.random.split(key, 4)
    src = jax.random.normal(k_src, (E, node_in), jnp.float32)
    dest = jax.random.normal(k_dst, (E, node_in), jnp.float32)
    edge_attr = jax.random.normal(k_edge, (E, edge_in), jnp.float32)
    params = init_params(k_par, node_in, edge_in, edge_out)

    ref = edge_layer_reference(src, dest, edge_attr, params)

    # Exact-numerics path: f32 matmul operands + f32 intermediate storage,
    # 4 full tiles of 64 rows (exercises the multi-tile parallel pipeline).
    out_f32 = edge_layer_forward(src, dest, edge_attr, params,
                                 mm_dtype=jnp.float32, store_dtype=jnp.float32,
                                 tile_rows=64)
    out_f32 = jax.block_until_ready(out_f32)
    assert out_f32.shape == (E, edge_out)
    assert jnp.allclose(out_f32, ref, atol=1e-3, rtol=1e-3), "f32 kernel mismatch vs reference"

    # Performance default: bf16 matmuls + bf16 h1/h2 storage (stats/bias/ReLU/output f32).
    # tile_rows=96 -> 3 tiles with a partial last tile, exercising the masked-stats path.
    out_bf16 = edge_layer_forward(src, dest, edge_attr, params, tile_rows=96)
    out_bf16 = jax.block_until_ready(out_bf16)
    assert out_bf16.shape == (E, edge_out)
    assert jnp.allclose(out_bf16, ref, atol=2e-1, rtol=2e-1), "bf16 kernel mismatch vs reference"

    # Auto-configured tiles / VMEM limit (single tile at this small E).
    out_auto = edge_layer_forward(src, dest, edge_attr, params)
    out_auto = jax.block_until_ready(out_auto)
    assert jnp.allclose(out_auto, ref, atol=2e-1, rtol=2e-1), "auto-config kernel mismatch"

    print("KERNEL_OK")
</pallas_src>

<mosaic_0001>
module attributes {stable_mosaic.version = 11 : i64} {
  func.func @_input_stats_kernel(%arg0: i32, %arg1: memref<64x16xf32, #tpu.memory_space<vmem>>, %arg2: memref<64x16xf32, #tpu.memory_space<vmem>>, %arg3: memref<64x8xf32, #tpu.memory_space<vmem>>, %arg4: memref<1x2x16xf32, #tpu.memory_space<vmem>>, %arg5: memref<1x2x16xf32, #tpu.memory_space<vmem>>, %arg6: memref<1x2x8xf32, #tpu.memory_space<vmem>>) attributes {dimension_semantics = [#tpu.dimension_semantics<parallel>], iteration_bounds = array<i64: 4>, scalar_prefetch = 0 : i64, scratch_operands = 0 : i64, tpu.core_type = #tpu.core_type<tc>, window_params = [{transform_indices = @transform_0, window_bounds = array<i64: 64, 16>}, {transform_indices = @transform_1, window_bounds = array<i64: 64, 16>}, {transform_indices = @transform_2, window_bounds = array<i64: 64, 8>}, {transform_indices = @transform_3, window_bounds = array<i64: 1, 2, 16>}, {transform_indices = @transform_4, window_bounds = array<i64: 1, 2, 16>}, {transform_indices = @transform_5, window_bounds = array<i64: 1, 2, 8>}]} {
    %cst = arith.constant 1.000000e+00 : f32
    %0 = vector.broadcast %cst : f32 to vector<1x64xf32>
    %c0 = arith.constant 0 : index
    %c0_0 = arith.constant 0 : index
    %1 = vector.load %arg1[%c0, %c0_0] : memref<64x16xf32, #tpu.memory_space<vmem>>, vector<64x16xf32>
    %cst_1 = arith.constant dense<0.000000e+00> : vector<1x16xf32>
    %2 = tpu.matmul %0, %1, %cst_1 {dimension_numbers = #tpu.dot_dimension_numbers<[1], [0], [0], [1], [0, 0, 1, 1], [], []>} : vector<1x64xf32>, vector<64x16xf32>, vector<1x16xf32> -> vector<1x16xf32>
    %3 = arith.mulf %1, %1 : vector<64x16xf32>
    %cst_2 = arith.constant dense<0.000000e+00> : vector<1x16xf32>
    %4 = tpu.matmul %0, %3, %cst_2 {dimension_numbers = #tpu.dot_dimension_numbers<[1], [0], [0], [1], [0, 0, 1, 1], [], []>} : vector<1x64xf32>, vector<64x16xf32>, vector<1x16xf32> -> vector<1x16xf32>
    %5 = tpu.concatenate %2, %4 in 0 : vector<1x16xf32>, vector<1x16xf32> -> vector<2x16xf32>
    %c0_3 = arith.constant 0 : index
    %c0_4 = arith.constant 0 : index
    %c0_5 = arith.constant 0 : index
    %6 = vector.load %arg4[%c0_3, %c0_4, %c0_5] : memref<1x2x16xf32, #tpu.memory_space<vmem>>, vector<1x2x16xf32>
    %7 = vector.shape_cast %6 : vector<1x2x16xf32> to vector<2x16xf32>
    %8 = vector.shape_cast %5 : vector<2x16xf32> to vector<1x2x16xf32>
    tpu.vector_store %arg4[%c0_3, %c0_4, %c0_5], %8 {strides = array<i32>} : memref<1x2x16xf32, #tpu.memory_space<vmem>>, vector<1x2x16xf32>,
    %c0_6 = arith.constant 0 : index
    %c0_7 = arith.constant 0 : index
    %9 = vector.load %arg2[%c0_6, %c0_7] : memref<64x16xf32, #tpu.memory_space<vmem>>, vector<64x16xf32>
    %cst_8 = arith.constant dense<0.000000e+00> : vector<1x16xf32>
    %10 = tpu.matmul %0, %9, %cst_8 {dimension_numbers = #tpu.dot_dimension_numbers<[1], [0], [0], [1], [0, 0, 1, 1], [], []>} : vector<1x64xf32>, vector<64x16xf32>, vector<1x16xf32> -> vector<1x16xf32>
    %11 = arith.mulf %9, %9 : vector<64x16xf32>
    %cst_9 = arith.constant dense<0.000000e+00> : vector<1x16xf32>
    %12 = tpu.matmul %0, %11, %cst_9 {dimension_numbers = #tpu.dot_dimension_numbers<[1], [0], [0], [1], [0, 0, 1, 1], [], []>} : vector<1x64xf32>, vector<64x16xf32>, vector<1x16xf32> -> vector<1x16xf32>
    %13 = tpu.concatenate %10, %12 in 0 : vector<1x16xf32>, vector<1x16xf32> -> vector<2x16xf32>
    %c0_10 = arith.constant 0 : index
    %c0_11 = arith.constant 0 : index
    %c0_12 = arith.constant 0 : index
    %14 = vector.load %arg5[%c0_10, %c0_11, %c0_12] : memref<1x2x16xf32, #tpu.memory_space<vmem>>, vector<1x2x16xf32>
    %15 = vector.shape_cast %14 : vector<1x2x16xf32> to vector<2x16xf32>
    %16 = vector.shape_cast %13 : vector<2x16xf32> to vector<1x2x16xf32>
    tpu.vector_store %arg5[%c0_10, %c0_11, %c0_12], %16 {strides = array<i32>} : memref<1x2x16xf32, #tpu.memory_space<vmem>>, vector<1x2x16xf32>,
    %c0_13 = arith.constant 0 : index
    %c0_14 = arith.constant 0 : index
    %17 = vector.load %arg3[%c0_13, %c0_14] : memref<64x8xf32, #tpu.memory_space<vmem>>, vector<64x8xf32>
    %cst_15 = arith.constant dense<0.000000e+00> : vector<1x8xf32>
    %18 = tpu.matmul %0, %17, %cst_15 {dimension_numbers = #tpu.dot_dimension_numbers<[1], [0], [0], [1], [0, 0, 1, 1], [], []>} : vector<1x64xf32>, vector<64x8xf32>, vector<1x8xf32> -> vector<1x8xf32>
    %19 = arith.mulf %17, %17 : vector<64x8xf32>
    %cst_16 = arith.constant dense<0.000000e+00> : vector<1x8xf32>
    %20 = tpu.matmul %0, %19, %cst_16 {dimension_numbers = #tpu.dot_dimension_numbers<[1], [0], [0], [1], [0, 0, 1, 1], [], []>} : vector<1x64xf32>, vector<64x8xf32>, vector<1x8xf32> -> vector<1x8xf32>
    %21 = tpu.concatenate %18, %20 in 0 : vector<1x8xf32>, vector<1x8xf32> -> vector<2x8xf32>
    %c0_17 = arith.constant 0 : index
    %c0_18 = arith.constant 0 : index
    %c0_19 = arith.constant 0 : index
    %22 = vector.load %arg6[%c0_17, %c0_18, %c0_19] : memref<1x2x8xf32, #tpu.memory_space<vmem>>, vector<1x2x8xf32>
    %23 = vector.shape_cast %22 : vector<1x2x8xf32> to vector<2x8xf32>
    %24 = vector.shape_cast %21 : vector<2x8xf32> to vector<1x2x8xf32>
    tpu.vector_store %arg6[%c0_17, %c0_18, %c0_19], %24 {strides = array<i32>} : memref<1x2x8xf32, #tpu.memory_space<vmem>>, vector<1x2x8xf32>,
    return
  }
  func.func @transform_0(%arg0: i32) -> (i32, i32) {
    %c0_i32 = arith.constant 0 : i32
    %c0_i32_0 = arith.constant 0 : i32
    return %arg0, %c0_i32 : i32, i32
  }
  func.func @transform_1(%arg0: i32) -> (i32, i32) {
    %c0_i32 = arith.constant 0 : i32
    %c0_i32_0 = arith.constant 0 : i32
    return %arg0, %c0_i32 : i32, i32
  }
  func.func @transform_2(%arg0: i32) -> (i32, i32) {
    %c0_i32 = arith.constant 0 : i32
    %c0_i32_0 = arith.constant 0 : i32
    return %arg0, %c0_i32 : i32, i32
  }
  func.func @transform_3(%arg0: i32) -> (i32, i32, i32) {
    %c0_i32 = arith.constant 0 : i32
    %c0_i32_0 = arith.constant 0 : i32
    %c0_i32_1 = arith.constant 0 : i32
    return %arg0, %c0_i32, %c0_i32_0 : i32, i32, i32
  }
  func.func @transform_4(%arg0: i32) -> (i32, i32, i32) {
    %c0_i32 = arith.constant 0 : i32
    %c0_i32_0 = arith.constant 0 : i32
    %c0_i32_1 = arith.constant 0 : i32
    return %arg0, %c0_i32, %c0_i32_0 : i32, i32, i32
  }
  func.func @transform_5(%arg0: i32) -> (i32, i32, i32) {
    %c0_i32 = arith.constant 0 : i32
    %c0_i32_0 = arith.constant 0 : i32
    %c0_i32_1 = arith.constant 0 : i32
    return %arg0, %c0_i32, %c0_i32_0 : i32, i32, i32
  }
}

</mosaic_0001>

<llo_original>
// kernel: tpu_custom_call.1
$region0: #{tpu_custom_call.1}
  #allocation0 [shape = 'u32[]', space=smem, size = 0x4, offset = 0x4, fixed_abs, tag = 'smem constant byte address 0x4 - core index']
  #allocation1 [shape = 'u32[144,128]{1,0:T(1,128)}', space=vmem, size = 0x12000, scoped, tag = 'internal scratch']
  %s0 = inlined_call_operand.vmem [shape: f32[256,16], index: 0, kind: input, shape index: {}]
  %s1 = inlined_call_operand.vmem [shape: f32[256,16], index: 1, kind: input, shape index: {}]
  %s2 = inlined_call_operand.vmem [shape: f32[256,8], index: 2, kind: input, shape index: {}]
  %s3 = inlined_call_operand.hbm [shape: f32[4,2,16], index: 3, kind: output, shape index: {0}]
  %s4 = inlined_call_operand.hbm [shape: f32[4,2,16], index: 4, kind: output, shape index: {1}]
  %s5 = inlined_call_operand.hbm [shape: f32[4,2,8], index: 5, kind: output, shape index: {2}]
  %6 = xla_tuple %s3, %s4, %s5
  %s7 = sld [smem:[#allocation0]]
  $region61: #{tpu_custom_call.1} parent=0
    _
  %s9 = ssub.s32 1, %s7
  %s10 = scalar_select 0, %s9, %s7
  $region1: #{tpu_custom_call.1} parent=0
    #allocation2 [shape = 'u8[2048]{0}', space=vmem, size = 0x800, scoped, tag = 'output window, operand 0']
    #allocation3 [shape = 's32[2]{0}', space=sflag, size = 0x8, scoped, tag = 'scoped memory for tpu_custom_call.1']
    #allocation4 [shape = 'u8[2048]{0}', space=vmem, size = 0x800, scoped, tag = 'output window, operand 1']
    #allocation5 [shape = 's32[2]{0}', space=sflag, size = 0x8, scoped, tag = 'scoped memory for tpu_custom_call.1']
    #allocation6 [shape = 'u8[2048]{0}', space=vmem, size = 0x800, scoped, tag = 'output window, operand 2']
    %11 = vsyncpa [#allocation3], 0
    %s12 = scalar_lea.sflag [#allocation3], 1
    %13 = vsyncpa %s12, 0
    %14 = vsyncpa [#allocation5], 0
    %s15 = scalar_lea.sflag [#allocation5], 1
    %16 = vsyncpa %s15, 0
    loop: start=0, step=1, limit=6
    $region2: #{tpu_custom_call.1} parent=1 // loop_pre_header
      _
    $region3: #{tpu_custom_call.1} parent=1 // loop_header
      %s18 = sphi 0, %s22
      %p19 = scmp.ge.s32.totalorder %s18, 6
      %s28 = sphi 0, %s30
      %s31 = sphi 0, %s28
      %s32 = sphi 0, %s31
      %s48 = sphi 0, %s32
      %s54 = sphi 0, %s56
      %s57 = sphi 0, %s54
      %s58 = sphi 0, %s57
      %s74 = sphi 0, %s58
      %s80 = sphi 0, %s82
      %s83 = sphi 0, %s80
      %s84 = sphi 0, %s83
      %s100 = sphi 0, %s84
      %s106 = sphi 0, %s108
      %s109 = sphi 0, %s106
      %s110 = sphi 0, %s109
      %s126 = sphi 0, %s110
      %s132 = sphi 0, %s134
      %s135 = sphi 0, %s132
      %s136 = sphi 0, %s135
      %s152 = sphi 0, %s136
      %s158 = sphi 0, %s160
      %s161 = sphi 0, %s158
      %s162 = sphi 0, %s161
      %s178 = sphi 0, %s162
    $region4: #{tpu_custom_call.1} parent=1 // loop_header_branch
      %21 = sbr.rel (%p19) target = $region8
    $region5: #{tpu_custom_call.1} parent=1 // loop_body
      %s23 = ssub.s32 %s18, 1
      %s24 = ssub.s32 %s18, 2
      %s25 = sadd.s32 %s18, 1
      %s26 = ssub.s32 %s18, %s25
      %p27 = scmp.eq.s32.totalorder %s26, 0
      %s29 = sadd.s32 %s28, 1
      %s30 = scalar_select %p27, %s28, %s29
      %p33 = pneg %p27
      %p34 = scmp.eq.s32.totalorder %s18, 3
      %p35 = por %p33, %p34
      %p36 = scmp.ne.s32.totalorder %s28, %s31
      %p37 = scmp.eq.s32.totalorder %s18, 0
      %p38 = por %p36, %p37
      %p39 = scmp.ne.s32.totalorder %s28, %s31
      %p40 = scmp.eq.s32.totalorder %s23, 3
      %p41 = por %p39, %p40
      %p42 = scmp.ne.s32.totalorder %s31, %s32
      %p43 = scmp.eq.s32.totalorder %s23, 0
      %p44 = por %p42, %p43
      %p45 = scmp.ne.s32.totalorder %s31, %s32
      %p46 = scmp.eq.s32.totalorder %s24, 3
      %p47 = por %p45, %p46
      %p49 = scmp.ne.s32.totalorder %s32, %s48
      %p50 = scmp.eq.s32.totalorder %s24, 0
      %p51 = por %p49, %p50
      %s52 = ssub.s32 %s18, %s25
      %p53 = scmp.eq.s32.totalorder %s52, 0
      %s55 = sadd.s32 %s54, 1
      %s56 = scalar_select %p53, %s54, %s55
      %p59 = pneg %p53
      %p60 = scmp.eq.s32.totalorder %s18, 3
      %p61 = por %p59, %p60
      %p62 = scmp.ne.s32.totalorder %s54, %s57
      %p63 = scmp.eq.s32.totalorder %s18, 0
      %p64 = por %p62, %p63
      %p65 = scmp.ne.s32.totalorder %s54, %s57
      %p66 = scmp.eq.s32.totalorder %s23, 3
      %p67 = por %p65, %p66
      %p68 = scmp.ne.s32.totalorder %s57, %s58
      %p69 = scmp.eq.s32.totalorder %s23, 0
      %p70 = por %p68, %p69
      %p71 = scmp.ne.s32.totalorder %s57, %s58
      %p72 = scmp.eq.s32.totalorder %s24, 3
      %p73 = por %p71, %p72
      %p75 = scmp.ne.s32.totalorder %s58, %s74
      %p76 = scmp.eq.s32.totalorder %s24, 0
      %p77 = por %p75, %p76
      %s78 = ssub.s32 %s18, %s25
      %p79 = scmp.eq.s32.totalorder %s78, 0
      %s81 = sadd.s32 %s80, 1
      %s82 = scalar_select %p79, %s80, %s81
      %p85 = pneg %p79
      %p86 = scmp.eq.s32.totalorder %s18, 3
      %p87 = por %p85, %p86
      %p88 = scmp.ne.s32.totalorder %s80, %s83
      %p89 = scmp.eq.s32.totalorder %s18, 0
      %p90 = por %p88, %p89
      %p91 = scmp.ne.s32.totalorder %s80, %s83
      %p92 = scmp.eq.s32.totalorder %s23, 3
      %p93 = por %p91, %p92
      %p94 = scmp.ne.s32.totalorder %s83, %s84
      %p95 = scmp.eq.s32.totalorder %s23, 0
      %p96 = por %p94, %p95
      %p97 = scmp.ne.s32.totalorder %s83, %s84
      %p98 = scmp.eq.s32.totalorder %s24, 3
      %p99 = por %p97, %p98
      %p101 = scmp.ne.s32.totalorder %s84, %s100
      %p102 = scmp.eq.s32.totalorder %s24, 0
      %p103 = por %p101, %p102
      %s104 = ssub.s32 %s18, %s25
      %p105 = scmp.eq.s32.totalorder %s104, 0
      %s107 = sadd.s32 %s106, 1
      %s108 = scalar_select %p105, %s106, %s107
      %p111 = pneg %p105
      %p112 = scmp.eq.s32.totalorder %s18, 3
      %p113 = por %p111, %p112
      %p114 = scmp.ne.s32.totalorder %s106, %s109
      %p115 = scmp.eq.s32.totalorder %s18, 0
      %p116 = por %p114, %p115
      %p117 = scmp.ne.s32.totalorder %s106, %s109
      %p118 = scmp.eq.s32.totalorder %s23, 3
      %p119 = por %p117, %p118
      %p120 = scmp.ne.s32.totalorder %s109, %s110
      %p121 = scmp.eq.s32.totalorder %s23, 0
      %p122 = por %p120, %p121
      %p123 = scmp.ne.s32.totalorder %s109, %s110
      %p124 = scmp.eq.s32.totalorder %s24, 3
      %p125 = por %p123, %p124
      %p127 = scmp.ne.s32.totalorder %s110, %s126
      %p128 = scmp.eq.s32.totalorder %s24, 0
      %p129 = por %p127, %p128
      %s130 = ssub.s32 %s18, %s25
      %p131 = scmp.eq.s32.totalorder %s130, 0
      %s133 = sadd.s32 %s132, 1
      %s134 = scalar_select %p131, %s132, %s133
      %p137 = pneg %p131
      %p138 = scmp.eq.s32.totalorder %s18, 3
      %p139 = por %p137, %p138
      %p140 = scmp.ne.s32.totalorder %s132, %s135
      %p141 = scmp.eq.s32.totalorder %s18, 0
      %p142 = por %p140, %p141
      %p143 = scmp.ne.s32.totalorder %s132, %s135
      %p144 = scmp.eq.s32.totalorder %s23, 3
      %p145 = por %p143, %p144
      %p146 = scmp.ne.s32.totalorder %s135, %s136
      %p147 = scmp.eq.s32.totalorder %s23, 0
      %p148 = por %p146, %p147
      %p149 = scmp.ne.s32.totalorder %s135, %s136
      %p150 = scmp.eq.s32.totalorder %s24, 3
      %p151 = por %p149, %p150
      %p153 = scmp.ne.s32.totalorder %s136, %s152
      %p154 = scmp.eq.s32.totalorder %s24, 0
      %p155 = por %p153, %p154
      %s156 = ssub.s32 %s18, %s25
      %p157 = scmp.eq.s32.totalorder %s156, 0
      %s159 = sadd.s32 %s158, 1
      %s160 = scalar_select %p157, %s158, %s159
      %p163 = pneg %p157
      %p164 = scmp.eq.s32.totalorder %s18, 3
      %p165 = por %p163, %p164
      %p166 = scmp.ne.s32.totalorder %s158, %s161
      %p167 = scmp.eq.s32.totalorder %s18, 0
      %p168 = por %p166, %p167
      %p169 = scmp.ne.s32.totalorder %s158, %s161
      %p170 = scmp.eq.s32.totalorder %s23, 3
      %p171 = por %p169, %p170
      %p172 = scmp.ne.s32.totalorder %s161, %s162
      %p173 = scmp.eq.s32.totalorder %s23, 0
      %p174 = por %p172, %p173
      %p175 = scmp.ne.s32.totalorder %s161, %s162
      %p176 = scmp.eq.s32.totalorder %s24, 3
      %p177 = por %p175, %p176
      %p179 = scmp.ne.s32.totalorder %s162, %s178
      %p180 = scmp.eq.s32.totalorder %s24, 0
      %p181 = por %p179, %p180
      %p182 = scmp.le.s32.totalorder 1, %s18
      %p183 = scmp.lt.s32.totalorder %s18, 5
      %p184 = pnand %p182, %p183
      %p185 = pneg %p184
      // Predicated region
      $region9: #{tpu_custom_call.1} parent=5 // pred_check
        _
      $region10: #{tpu_custom_call.1} parent=5 // pred_check_branch
        %187 = sbr.rel (%p184) target = $region12
      $region11: #{tpu_custom_call.1} parent=5 // pred_region
        %s188 = ssub.s32 %s18, 1
      $region12: #{tpu_custom_call.1} parent=5 // pred_fallthru
        _
      %p189 = scmp.lt.s32.totalorder %s18, 4
      // Predicated region
      $region13: #{tpu_custom_call.1} parent=5 // pred_check
        %p190 = pneg %p189
      $region14: #{tpu_custom_call.1} parent=5 // pred_check_branch
        %192 = sbr.rel (%p190) target = $region16
      $region15: #{tpu_custom_call.1} parent=5 // pred_region
        // Predicated region
        $region17: #{tpu_custom_call.1} parent=15 // pred_check
          %p193 = pneg %p38
        $region18: #{tpu_custom_call.1} parent=15 // pred_check_branch
          %195 = sbr.rel (%p193) target = $region20
        $region19: #{tpu_custom_call.1} parent=15 // pred_region
          %s196 = smul.u32 8, %s18
          %p197 = scmp.lt.s32.totalorder %s196, 31
          %s198 = scalar_select %p197, %s196, 31
          %s199 = smul.addr %s198, 8
          %s200 = scalar_lea.vmem %s0, %s199
          %s201 = smul.u32 8, %s18
        $region20: #{tpu_custom_call.1} parent=15 // pred_fallthru
          _
        // Predicated region
        $region21: #{tpu_custom_call.1} parent=15 // pred_check
          %p202 = pneg %p64
        $region22: #{tpu_custom_call.1} parent=15 // pred_check_branch
          %204 = sbr.rel (%p202) target = $region24
        $region23: #{tpu_custom_call.1} parent=15 // pred_region
          %s205 = smul.u32 8, %s18
          %p206 = scmp.lt.s32.totalorder %s205, 31
          %s207 = scalar_select %p206, %s205, 31
          %s208 = smul.addr %s207, 8
          %s209 = scalar_lea.vmem %s1, %s208
          %s210 = smul.u32 8, %s18
        $region24: #{tpu_custom_call.1} parent=15 // pred_fallthru
          _
        // Predicated region
        $region25: #{tpu_custom_call.1} parent=15 // pred_check
          %p211 = pneg %p90
        $region26: #{tpu_custom_call.1} parent=15 // pred_check_branch
          %213 = sbr.rel (%p211) target = $region28
        $region27: #{tpu_custom_call.1} parent=15 // pred_region
          %s214 = smul.u32 8, %s18
          %p215 = scmp.lt.s32.totalorder %s214, 31
          %s216 = scalar_select %p215, %s214, 31
          %s217 = smul.addr %s216, 8
          %s218 = scalar_lea.vmem %s2, %s217
          %s219 = smul.u32 8, %s18
        $region28: #{tpu_custom_call.1} parent=15 // pred_fallthru
          _
      $region16: #{tpu_custom_call.1} parent=5 // pred_fallthru
        _
      %p220 = scmp.le.s32.totalorder 1, %s18
      %p221 = scmp.lt.s32.totalorder %s18, 5
      %p222 = pnand %p220, %p221
      %p223 = pneg %p222
      // Predicated region
      $region29: #{tpu_custom_call.1} parent=5 // pred_check
        _
      $region30: #{tpu_custom_call.1} parent=5 // pred_check_branch
        %225 = sbr.rel (%p222) target = $region32
      $region31: #{tpu_custom_call.1} parent=5 // pred_region
        %s226 = ssub.s32 %s18, 1
        %s227 = smul.u32 8, %s23
        %p228 = scmp.lt.s32.totalorder %s227, 31
        %s229 = scalar_select %p228, %s227, 31
        %s230 = smul.addr %s229, 8
        %s231 = scalar_lea.vmem %s0, %s230
        %p232 = pneg %p44
        %p233 = pneg %p41
        %s234 = smul.u32 8, %s23
        %p235 = scmp.lt.s32.totalorder %s234, 31
        %s236 = scalar_select %p235, %s234, 31
        %s237 = smul.addr %s236, 8
        %s238 = scalar_lea.vmem %s1, %s237
        %p239 = pneg %p70
        %p240 = pneg %p67
        %s241 = smul.u32 8, %s23
        %p242 = scmp.lt.s32.totalorder %s241, 31
        %s243 = scalar_select %p242, %s241, 31
        %s244 = smul.addr %s243, 8
        %s245 = scalar_lea.vmem %s2, %s244
        %p246 = pneg %p96
        %p247 = pneg %p93
        %p248 = pneg %p122
        %p249 = pneg %p119
        %s250 = sand.u32 %s109, 1
        %s251 = scalar_lea.sflag [#allocation3], %s250
        %s252 = sand.u32 %s109, 1
        %s253 = smul.addr %s252, 2
        %s254 = scalar_lea.vmem [#allocation2], %s253
        %p255 = pneg %p148
        %p256 = pneg %p145
        %s257 = sand.u32 %s23, 1
        %s258 = scalar_lea.sflag [#allocation5], %s257
        %s259 = sand.u32 %s135, 1
        %s260 = smul.addr %s259, 2
        %s261 = scalar_lea.vmem [#allocation4], %s260
        %p262 = pneg %p174
        %p263 = pneg %p171
        %s264 = sand.u32 %s23, 1
        %s265 = scalar_lea.sflag [#allocation5], %s264
        %s266 = sand.u32 %s161, 1
        %s267 = smul.addr %s266, 2
        %s268 = scalar_lea.vmem [#allocation6], %s267
        %s269 = smul.u32 8, %s23
        %p270 = scmp.lt.s32.totalorder %s269, 31
        %s271 = scalar_select %p270, %s269, 31
        %s272 = smul.addr %s271, 8
        %s273 = scalar_lea.vmem %s0, %s272
        %s274 = smul.u32 8, %s23
        %s275 = smul.u32 8, %s23
        %p276 = scmp.lt.s32.totalorder %s275, 31
        %s277 = scalar_select %p276, %s275, 31
        %s278 = smul.addr %s277, 8
        %s279 = scalar_lea.vmem %s1, %s278
        %s280 = smul.u32 8, %s23
        %s281 = smul.u32 8, %s23
        %p282 = scmp.lt.s32.totalorder %s281, 31
        %s283 = scalar_select %p282, %s281, 31
        %s284 = smul.addr %s283, 8
        %s285 = scalar_lea.vmem %s2, %s284
        %s286 = smul.u32 8, %s23
        %v287 = vld [vmem:[%s273] sm:$0xff]
        %v288 = vld [vmem:[%s273 + $0x8] sm:$0xff]
        %v289 = vld [vmem:[%s273 + $0x10] sm:$0xff]
        %v290 = vld [vmem:[%s273 + $0x18] sm:$0xff]
        %v291 = vld [vmem:[%s273 + $0x20] sm:$0xff]
        %v292 = vld [vmem:[%s273 + $0x28] sm:$0xff]
        %v293 = vld [vmem:[%s273 + $0x30] sm:$0xff]
        %v294 = vld [vmem:[%s273 + $0x38] sm:$0xff]
        %vm295 = vcmask 523264
        %v297 = vsel %vm295, 1.0, 0
        %299 = vmatprep.subr.mxu0 0.0
        %300 = vmatpush1.msra.mxu0 %v287
        %301 = vmatprep.subr.mxu0 0.0
        %302 = vmatpush1.msra.mxu0 %v288
        %303 = vmatprep.subr.mxu0 0.0
        %304 = vmatpush1.msra.mxu0 %v289
        %305 = vmatprep.subr.mxu0 0.0
        %306 = vmatpush1.msra.mxu0 %v290
        %307 = vmatprep.subr.mxu0 0.0
        %308 = vmatpush1.msra.mxu0 %v291
        %309 = vmatprep.subr.mxu0 0.0
        %310 = vmatpush1.msra.mxu0 %v292
        %311 = vmatprep.subr.mxu0 0.0
        %312 = vmatpush1.msra.mxu0 %v293
        %313 = vmatprep.subr.mxu0 0.0
        %314 = vmatpush1.msra.mxu0 %v294
        %315 = vmatprep.subr.mxu0 0.0
        %316 = vmatpush1.msra.mxu0 0.0
        %317 = vmatprep.subr.mxu0 0.0
        %318 = vmatpush1.msra.mxu0 0.0
        %319 = vmatprep.subr.mxu0 0.0
        %320 = vmatpush1.msra.mxu0 0.0
        %321 = vmatprep.subr.mxu0 0.0
        %322 = vmatpush1.msra.mxu0 0.0
        %323 = vmatprep.subr.mxu0 0.0
        %324 = vmatpush1.msra.mxu0 0.0
        %325 = vmatprep.subr.mxu0 0.0
        %326 = vmatpush1.msra.mxu0 0.0
        %327 = vmatprep.subr.mxu0 0.0
        %328 = vmatpush1.msra.mxu0 0.0
        %329 = vmatprep.subr.mxu0 0.0
        %330 = vmatpush1.msra.mxu0 0.0
        %331 = vmatprep.subr.mxu0 0.0
        %332 = vmatpush1.msra.mxu0 0.0
        %333 = vmatprep.subr.mxu0 0.0
        %334 = vmatpush1.msra.mxu0 0.0
        %335 = vmatprep.subr.mxu0 0.0
        %336 = vmatpush1.msra.mxu0 0.0
        %337 = vmatprep.subr.mxu0 0.0
        %338 = vmatpush1.msra.mxu0 0.0
        %339 = vmatprep.subr.mxu0 0.0
        %340 = vmatpush1.msra.mxu0 0.0
        %341 = vmatprep.subr.mxu0 0.0
        %342 = vmatpush1.msra.mxu0 0.0
        %343 = vmatprep.subr.mxu0 0.0
        %344 = vmatpush1.msra.mxu0 0.0
        %345 = vmatprep.subr.mxu0 0.0
        %346 = vmatpush1.msra.mxu0 0.0
        %347 = vmatprep.subr.mxu0 0.0
        %348 = vmatpush1.msra.mxu0 0.0
        %349 = vmatprep.subr.mxu0 0.0
        %350 = vmatpush1.msra.mxu0 0.0
        %351 = vmatprep.subr.mxu0 0.0
        %352 = vmatpush1.msra.mxu0 0.0
        %353 = vmatprep.subr.mxu0 0.0
        %354 = vmatpush1.msra.mxu0 0.0
        %355 = vmatprep.subr.mxu0 0.0
        %356 = vmatpush1.msra.mxu0 0.0
        %357 = vmatprep.subr.mxu0 0.0
        %358 = vmatpush1.msra.mxu0 0.0
        %359 = vmatprep.subr.mxu0 0.0
        %360 = vmatpush1.msra.mxu0 0.0
        %361 = vmatprep.subr.mxu0 0.0
        %362 = vmatpush1.msra.mxu0 0.0
        %363 = vmatprep.mubr.f32.mxu0 0.0
        %364 = vmatmul.mubr.f32.gmra.mrb[0].mxu0 %v297
        %v365 = vpop.f32.mrb[0].mxu0
        %v366 = vadd.f32 0.0, %v365
        %v367 = vpop.f32.mrb[0].mxu0
        %368 = vdwg.mxu0
        %v369 = vmul.f32 %v287, %v287
        %v370 = vmul.f32 %v288, %v288
        %v371 = vmul.f32 %v289, %v289
        %v372 = vmul.f32 %v290, %v290
        %v373 = vmul.f32 %v291, %v291
        %v374 = vmul.f32 %v292, %v292
        %v375 = vmul.f32 %v293, %v293
        %v376 = vmul.f32 %v294, %v294
        %377 = vmatprep.subr.mxu0 0.0
        %378 = vmatpush1.msra.mxu0 %v369
        %379 = vmatprep.subr.mxu0 0.0
        %380 = vmatpush1.msra.mxu0 %v370
        %381 = vmatprep.subr.mxu0 0.0
        %382 = vmatpush1.msra.mxu0 %v371
        %383 = vmatprep.subr.mxu0 0.0
        %384 = vmatpush1.msra.mxu0 %v372
        %385 = vmatprep.subr.mxu0 0.0
        %386 = vmatpush1.msra.mxu0 %v373
        %387 = vmatprep.subr.mxu0 0.0
        %388 = vmatpush1.msra.mxu0 %v374
        %389 = vmatprep.subr.mxu0 0.0
        %390 = vmatpush1.msra.mxu0 %v375
        %391 = vmatprep.subr.mxu0 0.0
        %392 = vmatpush1.msra.mxu0 %v376
        %393 = vmatprep.subr.mxu0 0.0
        %394 = vmatpush1.msra.mxu0 0.0
        %395 = vmatprep.subr.mxu0 0.0
        %396 = vmatpush1.msra.mxu0 0.0
        %397 = vmatprep.subr.mxu0 0.0
        %398 = vmatpush1.msra.mxu0 0.0
        %399 = vmatprep.subr.mxu0 0.0
        %400 = vmatpush1.msra.mxu0 0.0
        %401 = vmatprep.subr.mxu0 0.0
        %402 = vmatpush1.msra.mxu0 0.0
        %403 = vmatprep.subr.mxu0 0.0
        %404 = vmatpush1.msra.mxu0 0.0
        %405 = vmatprep.subr.mxu0 0.0
        %406 = vmatpush1.msra.mxu0 0.0
        %407 = vmatprep.subr.mxu0 0.0
        %408 = vmatpush1.msra.mxu0 0.0
        %409 = vmatprep.subr.mxu0 0.0
        %410 = vmatpush1.msra.mxu0 0.0
        %411 = vmatprep.subr.mxu0 0.0
        %412 = vmatpush1.msra.mxu0 0.0
        %413 = vmatprep.subr.mxu0 0.0
        %414 = vmatpush1.msra.mxu0 0.0
        %415 = vmatprep.subr.mxu0 0.0
        %416 = vmatpush1.msra.mxu0 0.0
        %417 = vmatprep.subr.mxu0 0.0
        %418 = vmatpush1.msra.mxu0 0.0
        %419 = vmatprep.subr.mxu0 0.0
        %420 = vmatpush1.msra.mxu0 0.0
        %421 = vmatprep.subr.mxu0 0.0
        %422 = vmatpush1.msra.mxu0 0.0
        %423 = vmatprep.subr.mxu0 0.0
        %424 = vmatpush1.msra.mxu0 0.0
        %425 = vmatprep.subr.mxu0 0.0
        %426 = vmatpush1.msra.mxu0 0.0
        %427 = vmatprep.subr.mxu0 0.0
        %428 = vmatpush1.msra.mxu0 0.0
        %429 = vmatprep.subr.mxu0 0.0
        %430 = vmatpush1.msra.mxu0 0.0
        %431 = vmatprep.subr.mxu0 0.0
        %432 = vmatpush1.msra.mxu0 0.0
        %433 = vmatprep.subr.mxu0 0.0
        %434 = vmatpush1.msra.mxu0 0.0
        %435 = vmatprep.subr.mxu0 0.0
        %436 = vmatpush1.msra.mxu0 0.0
        %437 = vmatprep.subr.mxu0 0.0
        %438 = vmatpush1.msra.mxu0 0.0
        %439 = vmatprep.subr.mxu0 0.0
        %440 = vmatpush1.msra.mxu0 0.0
        %441 = vmatprep.mubr.f32.mxu0 0.0
        %442 = vmatmul.mubr.f32.gmra.mrb[0].mxu0 %v297
        %v443 = vpop.f32.mrb[0].mxu0
        %v444 = vadd.f32 0.0, %v443
        %v445 = vpop.f32.mrb[0].mxu0
        %446 = vdwg.mxu0
        %v448 = vrot.slane %v444, 7
        %vm450 = vcmask 1040384
        %v451 = vsel %vm450, %v366, %v448
        %vm452 = vcmask 123904
        %453 = vst.msk [vmem:[%s254] sm:$0x3] %vm452, %v451
        %v454 = vld [vmem:[%s279] sm:$0xff]
        %v455 = vld [vmem:[%s279 + $0x8] sm:$0xff]
        %v456 = vld [vmem:[%s279 + $0x10] sm:$0xff]
        %v457 = vld [vmem:[%s279 + $0x18] sm:$0xff]
        %v458 = vld [vmem:[%s279 + $0x20] sm:$0xff]
        %v459 = vld [vmem:[%s279 + $0x28] sm:$0xff]
        %v460 = vld [vmem:[%s279 + $0x30] sm:$0xff]
        %v461 = vld [vmem:[%s279 + $0x38] sm:$0xff]
        %462 = vmatprep.subr.mxu0 0.0
        %463 = vmatpush1.msra.mxu0 %v454
        %464 = vmatprep.subr.mxu0 0.0
        %465 = vmatpush1.msra.mxu0 %v455
        %466 = vmatprep.subr.mxu0 0.0
        %467 = vmatpush1.msra.mxu0 %v456
        %468 = vmatprep.subr.mxu0 0.0
        %469 = vmatpush1.msra.mxu0 %v457
        %470 = vmatprep.subr.mxu0 0.0
        %471 = vmatpush1.msra.mxu0 %v458
        %472 = vmatprep.subr.mxu0 0.0
        %473 = vmatpush1.msra.mxu0 %v459
        %474 = vmatprep.subr.mxu0 0.0
        %475 = vmatpush1.msra.mxu0 %v460
        %476 = vmatprep.subr.mxu0 0.0
        %477 = vmatpush1.msra.mxu0 %v461
        %478 = vmatprep.subr.mxu0 0.0
        %479 = vmatpush1.msra.mxu0 0.0
        %480 = vmatprep.subr.mxu0 0.0
        %481 = vmatpush1.msra.mxu0 0.0
        %482 = vmatprep.subr.mxu0 0.0
        %483 = vmatpush1.msra.mxu0 0.0
        %484 = vmatprep.subr.mxu0 0.0
        %485 = vmatpush1.msra.mxu0 0.0
        %486 = vmatprep.subr.mxu0 0.0
        %487 = vmatpush1.msra.mxu0 0.0
        %488 = vmatprep.subr.mxu0 0.0
        %489 = vmatpush1.msra.mxu0 0.0
        %490 = vmatprep.subr.mxu0 0.0
        %491 = vmatpush1.msra.mxu0 0.0
        %492 = vmatprep.subr.mxu0 0.0
        %493 = vmatpush1.msra.mxu0 0.0
        %494 = vmatprep.subr.mxu0 0.0
        %495 = vmatpush1.msra.mxu0 0.0
        %496 = vmatprep.subr.mxu0 0.0
        %497 = vmatpush1.msra.mxu0 0.0
        %498 = vmatprep.subr.mxu0 0.0
        %499 = vmatpush1.msra.mxu0 0.0
        %500 = vmatprep.subr.mxu0 0.0
        %501 = vmatpush1.msra.mxu0 0.0
        %502 = vmatprep.subr.mxu0 0.0
        %503 = vmatpush1.msra.mxu0 0.0
        %504 = vmatprep.subr.mxu0 0.0
        %505 = vmatpush1.msra.mxu0 0.0
        %506 = vmatprep.subr.mxu0 0.0
        %507 = vmatpush1.msra.mxu0 0.0
        %508 = vmatprep.subr.mxu0 0.0
        %509 = vmatpush1.msra.mxu0 0.0
        %510 = vmatprep.subr.mxu0 0.0
        %511 = vmatpush1.msra.mxu0 0.0
        %512 = vmatprep.subr.mxu0 0.0
        %513 = vmatpush1.msra.mxu0 0.0
        %514 = vmatprep.subr.mxu0 0.0
        %515 = vmatpush1.msra.mxu0 0.0
        %516 = vmatprep.subr.mxu0 0.0
        %517 = vmatpush1.msra.mxu0 0.0
        %518 = vmatprep.subr.mxu0 0.0
        %519 = vmatpush1.msra.mxu0 0.0
        %520 = vmatprep.subr.mxu0 0.0
        %521 = vmatpush1.msra.mxu0 0.0
        %522 = vmatprep.subr.mxu0 0.0
        %523 = vmatpush1.msra.mxu0 0.0
        %524 = vmatprep.subr.mxu0 0.0
        %525 = vmatpush1.msra.mxu0 0.0
        %526 = vmatprep.mubr.f32.mxu0 0.0
        %527 = vmatmul.mubr.f32.gmra.mrb[0].mxu0 %v297
        %v528 = vpop.f32.mrb[0].mxu0
        %v529 = vadd.f32 0.0, %v528
        %v530 = vpop.f32.mrb[0].mxu0
        %531 = vdwg.mxu0
        %v532 = vmul.f32 %v454, %v454
        %v533 = vmul.f32 %v455, %v455
        %v534 = vmul.f32 %v456, %v456
        %v535 = vmul.f32 %v457, %v457
        %v536 = vmul.f32 %v458, %v458
        %v537 = vmul.f32 %v459, %v459
        %v538 = vmul.f32 %v460, %v460
        %v539 = vmul.f32 %v461, %v461
        %540 = vmatprep.subr.mxu0 0.0
        %541 = vmatpush1.msra.mxu0 %v532
        %542 = vmatprep.subr.mxu0 0.0
        %543 = vmatpush1.msra.mxu0 %v533
        %544 = vmatprep.subr.mxu0 0.0
        %545 = vmatpush1.msra.mxu0 %v534
        %546 = vmatprep.subr.mxu0 0.0
        %547 = vmatpush1.msra.mxu0 %v535
        %548 = vmatprep.subr.mxu0 0.0
        %549 = vmatpush1.msra.mxu0 %v536
        %550 = vmatprep.subr.mxu0 0.0
        %551 = vmatpush1.msra.mxu0 %v537
        %552 = vmatprep.subr.mxu0 0.0
        %553 = vmatpush1.msra.mxu0 %v538
        %554 = vmatprep.subr.mxu0 0.0
        %555 = vmatpush1.msra.mxu0 %v539
        %556 = vmatprep.subr.mxu0 0.0
        %557 = vmatpush1.msra.mxu0 0.0
        %558 = vmatprep.subr.mxu0 0.0
        %559 = vmatpush1.msra.mxu0 0.0
        %560 = vmatprep.subr.mxu0 0.0
        %561 = vmatpush1.msra.mxu0 0.0
        %562 = vmatprep.subr.mxu0 0.0
        %563 = vmatpush1.msra.mxu0 0.0
        %564 = vmatprep.subr.mxu0 0.0
        %565 = vmatpush1.msra.mxu0 0.0
        %566 = vmatprep.subr.mxu0 0.0
        %567 = vmatpush1.msra.mxu0 0.0
        %568 = vmatprep.subr.mxu0 0.0
        %569 = vmatpush1.msra.mxu0 0.0
        %570 = vmatprep.subr.mxu0 0.0
        %571 = vmatpush1.msra.mxu0 0.0
        %572 = vmatprep.subr.mxu0 0.0
        %573 = vmatpush1.msra.mxu0 0.0
        %574 = vmatprep.subr.mxu0 0.0
        %575 = vmatpush1.msra.mxu0 0.0
        %576 = vmatprep.subr.mxu0 0.0
        %577 = vmatpush1.msra.mxu0 0.0
        %578 = vmatprep.subr.mxu0 0.0
        %579 = vmatpush1.msra.mxu0 0.0
        %580 = vmatprep.subr.mxu0 0.0
        %581 = vmatpush1.msra.mxu0 0.0
        %582 = vmatprep.subr.mxu0 0.0
        %583 = vmatpush1.msra.mxu0 0.0
        %584 = vmatprep.subr.mxu0 0.0
        %585 = vmatpush1.msra.mxu0 0.0
        %586 = vmatprep.subr.mxu0 0.0
        %587 = vmatpush1.msra.mxu0 0.0
        %588 = vmatprep.subr.mxu0 0.0
        %589 = vmatpush1.msra.mxu0 0.0
        %590 = vmatprep.subr.mxu0 0.0
        %591 = vmatpush1.msra.mxu0 0.0
        %592 = vmatprep.subr.mxu0 0.0
        %593 = vmatpush1.msra.mxu0 0.0
        %594 = vmatprep.subr.mxu0 0.0
        %595 = vmatpush1.msra.mxu0 0.0
        %596 = vmatprep.subr.mxu0 0.0
        %597 = vmatpush1.msra.mxu0 0.0
        %598 = vmatprep.subr.mxu0 0.0
        %599 = vmatpush1.msra.mxu0 0.0
        %600 = vmatprep.subr.mxu0 0.0
        %601 = vmatpush1.msra.mxu0 0.0
        %602 = vmatprep.subr.mxu0 0.0
        %603 = vmatpush1.msra.mxu0 0.0
        %604 = vmatprep.mubr.f32.mxu0 0.0
        %605 = vmatmul.mubr.f32.gmra.mrb[0].mxu0 %v297
        %v606 = vpop.f32.mrb[0].mxu0
        %v607 = vadd.f32 0.0, %v606
        %v608 = vpop.f32.mrb[0].mxu0
        %609 = vdwg.mxu0
        %v611 = vrot.slane %v607, 7
        %v613 = vsel %vm450, %v529, %v611
        %614 = vst.msk [vmem:[%s261] sm:$0x3] %vm452, %v613
        %v615 = vld [vmem:[%s285] sm:$0xff]
        %v616 = vld [vmem:[%s285 + $0x8] sm:$0xff]
        %v617 = vld [vmem:[%s285 + $0x10] sm:$0xff]
        %v618 = vld [vmem:[%s285 + $0x18] sm:$0xff]
        %v619 = vld [vmem:[%s285 + $0x20] sm:$0xff]
        %v620 = vld [vmem:[%s285 + $0x28] sm:$0xff]
        %v621 = vld [vmem:[%s285 + $0x30] sm:$0xff]
        %v622 = vld [vmem:[%s285 + $0x38] sm:$0xff]
        %623 = vmatprep.subr.mxu0 0.0
        %624 = vmatpush1.msra.mxu0 %v615
        %625 = vmatprep.subr.mxu0 0.0
        %626 = vmatpush1.msra.mxu0 %v616
        %627 = vmatprep.subr.mxu0 0.0
        %628 = vmatpush1.msra.mxu0 %v617
        %629 = vmatprep.subr.mxu0 0.0
        %630 = vmatpush1.msra.mxu0 %v618
        %631 = vmatprep.subr.mxu0 0.0
        %632 = vmatpush1.msra.mxu0 %v619
        %633 = vmatprep.subr.mxu0 0.0
        %634 = vmatpush1.msra.mxu0 %v620
        %635 = vmatprep.subr.mxu0 0.0
        %636 = vmatpush1.msra.mxu0 %v621
        %637 = vmatprep.subr.mxu0 0.0
        %638 = vmatpush1.msra.mxu0 %v622
        %639 = vmatprep.subr.mxu0 0.0
        %640 = vmatpush1.msra.mxu0 0.0
        %641 = vmatprep.subr.mxu0 0.0
        %642 = vmatpush1.msra.mxu0 0.0
        %643 = vmatprep.subr.mxu0 0.0
        %644 = vmatpush1.msra.mxu0 0.0
        %645 = vmatprep.subr.mxu0 0.0
        %646 = vmatpush1.msra.mxu0 0.0
        %647 = vmatprep.subr.mxu0 0.0
        %648 = vmatpush1.msra.mxu0 0.0
        %649 = vmatprep.subr.mxu0 0.0
        %650 = vmatpush1.msra.mxu0 0.0
        %651 = vmatprep.subr.mxu0 0.0
        %652 = vmatpush1.msra.mxu0 0.0
        %653 = vmatprep.subr.mxu0 0.0
        %654 = vmatpush1.msra.mxu0 0.0
        %655 = vmatprep.subr.mxu0 0.0
        %656 = vmatpush1.msra.mxu0 0.0
        %657 = vmatprep.subr.mxu0 0.0
        %658 = vmatpush1.msra.mxu0 0.0
        %659 = vmatprep.subr.mxu0 0.0
        %660 = vmatpush1.msra.mxu0 0.0
        %661 = vmatprep.subr.mxu0 0.0
        %662 = vmatpush1.msra.mxu0 0.0
        %663 = vmatprep.subr.mxu0 0.0
        %664 = vmatpush1.msra.mxu0 0.0
        %665 = vmatprep.subr.mxu0 0.0
        %666 = vmatpush1.msra.mxu0 0.0
        %667 = vmatprep.subr.mxu0 0.0
        %668 = vmatpush1.msra.mxu0 0.0
        %669 = vmatprep.subr.mxu0 0.0
        %670 = vmatpush1.msra.mxu0 0.0
        %671 = vmatprep.subr.mxu0 0.0
        %672 = vmatpush1.msra.mxu0 0.0
        %673 = vmatprep.subr.mxu0 0.0
        %674 = vmatpush1.msra.mxu0 0.0
        %675 = vmatprep.subr.mxu0 0.0
        %676 = vmatpush1.msra.mxu0 0.0
        %677 = vmatprep.subr.mxu0 0.0
        %678 = vmatpush1.msra.mxu0 0.0
        %679 = vmatprep.subr.mxu0 0.0
        %680 = vmatpush1.msra.mxu0 0.0
        %681 = vmatprep.subr.mxu0 0.0
        %682 = vmatpush1.msra.mxu0 0.0
        %683 = vmatprep.subr.mxu0 0.0
        %684 = vmatpush1.msra.mxu0 0.0
        %685 = vmatprep.subr.mxu0 0.0
        %686 = vmatpush1.msra.mxu0 0.0
        %687 = vmatprep.mubr.f32.mxu0 0.0
        %688 = vmatmul.mubr.f32.gmra.mrb[0].mxu0 %v297
        %v689 = vpop.f32.mrb[0].mxu0
        %v690 = vadd.f32 0.0, %v689
        %v691 = vpop.f32.mrb[0].mxu0
        %692 = vdwg.mxu0
        %v693 = vmul.f32 %v615, %v615
        %v694 = vmul.f32 %v616, %v616
        %v695 = vmul.f32 %v617, %v617
        %v696 = vmul.f32 %v618, %v618
        %v697 = vmul.f32 %v619, %v619
        %v698 = vmul.f32 %v620, %v620
        %v699 = vmul.f32 %v621, %v621
        %v700 = vmul.f32 %v622, %v622
        %701 = vmatprep.subr.mxu0 0.0
        %702 = vmatpush1.msra.mxu0 %v693
        %703 = vmatprep.subr.mxu0 0.0
        %704 = vmatpush1.msra.mxu0 %v694
        %705 = vmatprep.subr.mxu0 0.0
        %706 = vmatpush1.msra.mxu0 %v695
        %707 = vmatprep.subr.mxu0 0.0
        %708 = vmatpush1.msra.mxu0 %v696
        %709 = vmatprep.subr.mxu0 0.0
        %710 = vmatpush1.msra.mxu0 %v697
        %711 = vmatprep.subr.mxu0 0.0
        %712 = vmatpush1.msra.mxu0 %v698
        %713 = vmatprep.subr.mxu0 0.0
        %714 = vmatpush1.msra.mxu0 %v699
        %715 = vmatprep.subr.mxu0 0.0
        %716 = vmatpush1.msra.mxu0 %v700
        %717 = vmatprep.subr.mxu0 0.0
        %718 = vmatpush1.msra.mxu0 0.0
        %719 = vmatprep.subr.mxu0 0.0
        %720 = vmatpush1.msra.mxu0 0.0
        %721 = vmatprep.subr.mxu0 0.0
        %722 = vmatpush1.msra.mxu0 0.0
        %723 = vmatprep.subr.mxu0 0.0
        %724 = vmatpush1.msra.mxu0 0.0
        %725 = vmatprep.subr.mxu0 0.0
        %726 = vmatpush1.msra.mxu0 0.0
        %727 = vmatprep.subr.mxu0 0.0
        %728 = vmatpush1.msra.mxu0 0.0
        %729 = vmatprep.subr.mxu0 0.0
        %730 = vmatpush1.msra.mxu0 0.0
        %731 = vmatprep.subr.mxu0 0.0
        %732 = vmatpush1.msra.mxu0 0.0
        %733 = vmatprep.subr.mxu0 0.0
        %734 = vmatpush1.msra.mxu0 0.0
        %735 = vmatprep.subr.mxu0 0.0
        %736 = vmatpush1.msra.mxu0 0.0
        %737 = vmatprep.subr.mxu0 0.0
        %738 = vmatpush1.msra.mxu0 0.0
        %739 = vmatprep.subr.mxu0 0.0
        %740 = vmatpush1.msra.mxu0 0.0
        %741 = vmatprep.subr.mxu0 0.0
        %742 = vmatpush1.msra.mxu0 0.0
        %743 = vmatprep.subr.mxu0 0.0
        %744 = vmatpush1.msra.mxu0 0.0
        %745 = vmatprep.subr.mxu0 0.0
        %746 = vmatpush1.msra.mxu0 0.0
        %747 = vmatprep.subr.mxu0 0.0
        %748 = vmatpush1.msra.mxu0 0.0
        %749 = vmatprep.subr.mxu0 0.0
        %750 = vmatpush1.msra.mxu0 0.0
        %751 = vmatprep.subr.mxu0 0.0
        %752 = vmatpush1.msra.mxu0 0.0
        %753 = vmatprep.subr.mxu0 0.0
        %754 = vmatpush1.msra.mxu0 0.0
        %755 = vmatprep.subr.mxu0 0.0
        %756 = vmatpush1.msra.mxu0 0.0
        %757 = vmatprep.subr.mxu0 0.0
        %758 = vmatpush1.msra.mxu0 0.0
        %759 = vmatprep.subr.mxu0 0.0
        %760 = vmatpush1.msra.mxu0 0.0
        %761 = vmatprep.subr.mxu0 0.0
        %762 = vmatpush1.msra.mxu0 0.0
        %763 = vmatprep.subr.mxu0 0.0
        %764 = vmatpush1.msra.mxu0 0.0
        %765 = vmatprep.mubr.f32.mxu0 0.0
        %766 = vmatmul.mubr.f32.gmra.mrb[0].mxu0 %v297
        %v767 = vpop.f32.mrb[0].mxu0
        %v768 = vadd.f32 0.0, %v767
        %v769 = vpop.f32.mrb[0].mxu0
        %770 = vdwg.mxu0
        %v772 = vrot.slane %v768, 7
        %v774 = vsel %vm450, %v690, %v772
        %vm775 = vcmask 58368
        %776 = vst.msk [vmem:[%s268] sm:$0x3] %vm775, %v774
        %s777 = sand.u32 %s109, 1
        %s778 = scalar_lea.sflag [#allocation3], %s777
        %s779 = sand.u32 %s109, 1
        %s780 = smul.addr %s779, 2
        %s781 = scalar_lea.vmem [#allocation2], %s780
        %s782 = sand.u32 %s23, 1
        %s783 = scalar_lea.sflag [#allocation5], %s782
        %s784 = sand.u32 %s135, 1
        %s785 = smul.addr %s784, 2
        %s786 = scalar_lea.vmem [#allocation4], %s785
        %s787 = sand.u32 %s23, 1
        %s788 = scalar_lea.sflag [#allocation5], %s787
        %s789 = sand.u32 %s161, 1
        %s790 = smul.addr %s789, 2
        %s791 = scalar_lea.vmem [#allocation6], %s790
        // Predicated region
        $region33: #{tpu_custom_call.1} parent=31 // pred_check
          %p792 = pneg %p119
        $region34: #{tpu_custom_call.1} parent=31 // pred_check_branch
          %794 = sbr.rel (%p792) target = $region36
        $region35: #{tpu_custom_call.1} parent=31 // pred_region
          %s796 = ssub.s32 32, 32
          %797 = vsyncadd %s778, %s796
          %s798 = smul.addr %s23, 32
          %s799 = scalar_lea.hbm %s3, %s798
          %s801 = sshll.u32 %s781, 4
          %s802 = int_to_ptr.vmem [resolvable:$true] %s801
          %804 = dma.vmem_to_hbm [thread:$0]  %s802, 32, %s799, %s778
        $region36: #{tpu_custom_call.1} parent=31 // pred_fallthru
          _
        // Predicated region
        $region37: #{tpu_custom_call.1} parent=31 // pred_check
          %p805 = pneg %p145
        $region38: #{tpu_custom_call.1} parent=31 // pred_check_branch
          %807 = sbr.rel (%p805) target = $region40
        $region39: #{tpu_custom_call.1} parent=31 // pred_region
          %s809 = ssub.s32 32, 32
          %810 = vsyncadd %s783, %s809
          %s811 = smul.addr %s23, 32
          %s812 = scalar_lea.hbm %s4, %s811
          %s814 = sshll.u32 %s786, 4
          %s815 = int_to_ptr.vmem [resolvable:$true] %s814
          %817 = dma.vmem_to_hbm [thread:$0]  %s815, 32, %s812, %s783
        $region40: #{tpu_custom_call.1} parent=31 // pred_fallthru
          _
        // Predicated region
        $region41: #{tpu_custom_call.1} parent=31 // pred_check
          %p818 = pneg %p171
        $region42: #{tpu_custom_call.1} parent=31 // pred_check_branch
          %820 = sbr.rel (%p818) target = $region44
        $region43: #{tpu_custom_call.1} parent=31 // pred_region
          %s822 = ssub.s32 32, 32
          %823 = vsyncadd %s788, %s822
          %s824 = smul.addr %s23, 32
          %s825 = scalar_lea.hbm %s5, %s824
          %s827 = sshll.u32 %s791, 4
          %s828 = int_to_ptr.vmem [resolvable:$true] %s827
          %830 = dma.vmem_to_hbm [thread:$0]  %s828, 32, %s825, %s788
        $region44: #{tpu_custom_call.1} parent=31 // pred_fallthru
          _
      $region32: #{tpu_custom_call.1} parent=5 // pred_fallthru
        _
      %p831 = scmp.le.s32.totalorder 2, %s18
      // Predicated region
      $region45: #{tpu_custom_call.1} parent=5 // pred_check
        %p832 = pneg %p831
      $region46: #{tpu_custom_call.1} parent=5 // pred_check_branch
        %834 = sbr.rel (%p832) target = $region48
      $region47: #{tpu_custom_call.1} parent=5 // pred_region
        %s835 = ssub.s32 %s18, 2
        // Predicated region
        $region49: #{tpu_custom_call.1} parent=47 // pred_check
          %p836 = pneg %p125
        $region50: #{tpu_custom_call.1} parent=47 // pred_check_branch
          %838 = sbr.rel (%p836) target = $region52
        $region51: #{tpu_custom_call.1} parent=47 // pred_region
          %s839 = sand.u32 %s110, 1
          %s840 = scalar_lea.sflag [#allocation3], %s839
          %s841 = sand.u32 %s110, 1
          %s842 = smul.addr %s841, 2
          %s843 = scalar_lea.vmem [#allocation2], %s842
          %844 = dma.done %s840, 32
        $region52: #{tpu_custom_call.1} parent=47 // pred_fallthru
          _
        // Predicated region
        $region53: #{tpu_custom_call.1} parent=47 // pred_check
          %p845 = pneg %p151
        $region54: #{tpu_custom_call.1} parent=47 // pred_check_branch
          %847 = sbr.rel (%p845) target = $region56
        $region55: #{tpu_custom_call.1} parent=47 // pred_region
          %s848 = sand.u32 %s24, 1
          %s849 = scalar_lea.sflag [#allocation5], %s848
          %s850 = sand.u32 %s136, 1
          %s851 = smul.addr %s850, 2
          %s852 = scalar_lea.vmem [#allocation4], %s851
          %853 = dma.done %s849, 32
        $region56: #{tpu_custom_call.1} parent=47 // pred_fallthru
          _
        // Predicated region
        $region57: #{tpu_custom_call.1} parent=47 // pred_check
          %p854 = pneg %p177
        $region58: #{tpu_custom_call.1} parent=47 // pred_check_branch
          %856 = sbr.rel (%p854) target = $region60
        $region59: #{tpu_custom_call.1} parent=47 // pred_region
          %s857 = sand.u32 %s24, 1
          %s858 = scalar_lea.sflag [#allocation5], %s857
          %s859 = sand.u32 %s162, 1
          %s860 = smul.addr %s859, 2
          %s861 = scalar_lea.vmem [#allocation6], %s860
          %862 = dma.done %s858, 32
        $region60: #{tpu_custom_call.1} parent=47 // pred_fallthru
          _
      $region48: #{tpu_custom_call.1} parent=5 // pred_fallthru
        _
    $region6: #{tpu_custom_call.1} parent=1 // loop_footer
      %s22 = sadd.s32 1, %s18
    $region7: #{tpu_custom_call.1} parent=1 // loop_footer_branch
      %17 = sbr.rel target = $region3
    $region8: #{tpu_custom_call.1} parent=1 // loop_exit
      _
    %863 = vsyncpa [#allocation3], 1
    %s864 = scalar_lea.sflag [#allocation3], 1
    %865 = vsyncpa %s864, 1
    %866 = vsyncpa [#allocation5], 1
    %s867 = scalar_lea.sflag [#allocation5], 1
    %868 = vsyncpa %s867, 1

</llo_original>
